<compile_context>
chip_gen: v7x
topology: tpu7x:2x2x1
jax: 0.10.0
libtpu: 0.0.40
codegen_flags: <defaults>
</compile_context>

<pallas_src>
import functools

import jax
import jax.numpy as jnp
from jax.experimental import pallas as pl
from jax.experimental.pallas import tpu as pltpu


def _round_up(x, m):
    return ((x + m - 1) // m) * m


def _default_block_b():
    # v5e: 4x128x128 MXU + 16 MiB default scoped VMEM -> bt=128.
    # v6e / v7x: 2x256x256 MXU -> bt=256.
    try:
        kind = jax.devices()[0].device_kind.lower()
    except Exception:
        return 256
    if "v5 lite" in kind or "v5e" in kind or "v5lite" in kind:
        return 128
    return 256


def _infonce_kernel(*refs, has_pad, multi_d):
    if has_pad:
        bias_ref, a_ref, p_ref, o_ref, *scratch = refs
    else:
        a_ref, p_ref, o_ref, *scratch = refs
        bias_ref = None
    m_ref, l_ref, diag_ref = scratch[:3]
    s_acc_ref = scratch[3] if multi_d else None

    i = pl.program_id(0)            # anchor row tile        (parallel)
    k = pl.program_id(1)            # positive column tile   (arbitrary)
    nk = pl.num_programs(1)

    # (bt, dt) @ (dt, bt) -> (bt, bt) on the MXU, f32 accumulation. Operands
    # arrive pre-normalized; 1/temperature is pre-folded into the anchor.
    s_part = jax.lax.dot_general(
        a_ref[...], p_ref[...],
        dimension_numbers=(((1,), (0,)), ((), ())),
        preferred_element_type=jnp.float32)

    if multi_d:
        d = pl.program_id(2)        # contraction (D) chunk  (arbitrary, last)
        nd = pl.num_programs(2)
        last_d = d == nd - 1

        @pl.when(d == 0)
        def _():
            s_acc_ref[...] = s_part

        @pl.when(jnp.logical_and(d != 0, jnp.logical_not(last_d)))
        def _():
            s_acc_ref[...] = s_acc_ref[...] + s_part

        init_cond = jnp.logical_and(k == 0, d == 0)
    else:
        init_cond = k == 0

    @pl.when(init_cond)
    def _init():
        m_ref[...] = jnp.full(m_ref.shape, -jnp.inf, dtype=jnp.float32)
        l_ref[...] = jnp.zeros(l_ref.shape, dtype=jnp.float32)

    def _online_lse_update():
        s = (s_acc_ref[...] + s_part) if multi_d else s_part

        # Diagonal term sim[r, r]: when the column tile holds the matching
        # rows (k == i) the diagonal sits at local (r, r). Once per row tile.
        @pl.when(k == i)
        def _diag():
            r = jax.lax.broadcasted_iota(jnp.int32, s.shape, 0)
            c = jax.lax.broadcasted_iota(jnp.int32, s.shape, 1)
            diag_ref[...] = jnp.sum(
                jnp.where(r == c, s, 0.0), axis=-1, keepdims=True)

        if has_pad:
            # Precomputed column bias: 0 on valid columns, -1e30 on padding.
            s = s + bias_ref[...]

        # Flash-style online logsumexp over column tiles.
        m_prev = m_ref[...]
        m_new = jnp.maximum(m_prev, jnp.max(s, axis=-1, keepdims=True))
        l_ref[...] = (l_ref[...] * jnp.exp(m_prev - m_new)
                      + jnp.sum(jnp.exp(s - m_new), axis=-1, keepdims=True))
        m_ref[...] = m_new
        # TODO(synk): for small D the EUP exp is the binding slot; exp in bf16
        # with an f32-accumulated row sum would roughly double EUP throughput.

        @pl.when(k == nk - 1)
        def _finalize():
            # per-row loss: logsumexp(sim[r, :]) - sim[r, r]
            o_ref[...] = m_ref[...] + jnp.log(l_ref[...]) - diag_ref[...]

    if multi_d:
        pl.when(last_d)(_online_lse_update)
    else:
        _online_lse_update()


def infonce_loss(anchor, positive, temperature=0.07, *,
                 block_b=None, block_d=1024, compute_dtype=jnp.bfloat16):
    """Pallas TPU implementation of InfoNCELoss.forward (returns scalar f32)."""
    assert anchor.shape == positive.shape and anchor.ndim == 2
    B, D = anchor.shape
    if block_b is None:
        block_b = _default_block_b()

    # ---- Row (batch) tiling: lane-aligned multi-tile, or one full tile. ----
    if B <= block_b:
        bt = _round_up(max(B, 8), 8)          # single tile, full-extent blocks
    else:
        bt = _round_up(block_b, 128)          # keep sim-tile columns lane-aligned
    B_pad = _round_up(B, bt)
    n_tiles = B_pad // bt
    has_pad = B_pad != B

    # ---- Contraction (D) tiling: bounds VMEM for large D (v7x: 64 MiB). ----
    D_pad = _round_up(D, 128)
    d_block = min(D_pad, _round_up(block_d, 128))
    D_pad = _round_up(D_pad, d_block)
    n_d = D_pad // d_block
    multi_d = n_d > 1

    # ---- Hoisted normalization (+ 1/temperature), pad, cast, transpose.
    # One fused O(B*D) XLA pass; the kernel never re-normalizes per tile. ----
    eps2 = jnp.float32(1e-24)                 # matches F.normalize eps=1e-12
    a32 = anchor.astype(jnp.float32)
    p32 = positive.astype(jnp.float32)
    a_n = a32 * (jax.lax.rsqrt(jnp.maximum(
        jnp.sum(a32 * a32, axis=-1, keepdims=True), eps2))
        * jnp.float32(1.0 / temperature))
    p_n = p32 * jax.lax.rsqrt(jnp.maximum(
        jnp.sum(p32 * p32, axis=-1, keepdims=True), eps2))
    a_nt = jnp.pad(a_n, ((0, B_pad - B), (0, D_pad - D))).astype(compute_dtype)
    # positive pre-transposed to (D_pad, B_pad): MXU RHS in natural (K, N) layout.
    p_nt = jnp.pad(p_n, ((0, B_pad - B), (0, D_pad - D))).astype(compute_dtype).T

    args = [a_nt, p_nt]
    in_specs = [
        pl.BlockSpec((bt, d_block), lambda i, k, d: (i, d)),   # anchor rows
        pl.BlockSpec((d_block, bt), lambda i, k, d: (d, k)),   # positive cols
    ]
    if has_pad:
        col = jnp.arange(B_pad)
        bias = jnp.where(col < B, 0.0, -1e30).astype(jnp.float32)[None, :]
        args = [bias] + args
        in_specs = [pl.BlockSpec((1, bt), lambda i, k, d: (0, k))] + in_specs

    scratch_shapes = [pltpu.VMEM((bt, 1), jnp.float32),    # running max  m
                      pltpu.VMEM((bt, 1), jnp.float32),    # running sum  l
                      pltpu.VMEM((bt, 1), jnp.float32)]    # diagonal term
    if multi_d:
        scratch_shapes.append(pltpu.VMEM((bt, bt), jnp.float32))  # s accumulator

    in_itemsize = jnp.dtype(compute_dtype).itemsize
    vmem_needed = (
        2 * bt * d_block * in_itemsize          # anchor tile, double buffered
        + 2 * d_block * bt * in_itemsize        # positive tile, double buffered
        + 2 * 8 * bt * 4                        # bias tile (sublane padded)
        + 2 * bt * 128 * 4                      # per-row output (lane padded)
        + 3 * bt * 128 * 4                      # m / l / diag scratch
        + (2 if multi_d else 1) * bt * bt * 4)  # s tile (+ accumulator)
    vmem_limit = int(min(64 * 1024 * 1024, max(32 * 1024 * 1024, 2 * vmem_needed)))

    # HBM traffic: positive re-read once per row tile; anchor once per column
    # tile when D is chunked, once overall otherwise.
    a_reads = n_tiles if multi_d else 1
    bytes_accessed = ((a_reads + n_tiles) * B_pad * D_pad * in_itemsize
                      + B_pad * 4 * (2 if has_pad else 1))

    kernel = functools.partial(_infonce_kernel, has_pad=has_pad, multi_d=multi_d)

    per_row = pl.pallas_call(
        kernel,
        out_shape=jax.ShapeDtypeStruct((B_pad, 1), jnp.float32),
        grid_spec=pltpu.PrefetchScalarGridSpec(
            num_scalar_prefetch=0,
            grid=(n_tiles, n_tiles, n_d),
            in_specs=in_specs,
            out_specs=pl.BlockSpec((bt, 1), lambda i, k, d: (i, 0)),
            scratch_shapes=scratch_shapes),
        compiler_params=pltpu.CompilerParams(
            dimension_semantics=("parallel", "arbitrary", "arbitrary"),
            vmem_limit_bytes=vmem_limit),
        cost_estimate=pl.CostEstimate(
            flops=2 * B_pad * B_pad * D_pad,
            transcendentals=B_pad * B_pad,
            bytes_accessed=bytes_accessed),
    )(*args)

    # TODO(synk): on v7x with a single row tile (B <= bt) one TensorCore idles;
    # split the column axis across cores with a two-partial-LSE combine.

    # Final mean over the B valid rows (tiny O(B) wrapper op).
    return jnp.sum(per_row[:B, 0]) / jnp.float32(B)


def _infonce_ref(anchor, positive, temperature=0.07):
    """Pure-JAX reference mirroring the PyTorch module, for verification."""
    eps = 1e-12
    a = anchor / jnp.maximum(jnp.linalg.norm(anchor, axis=-1, keepdims=True), eps)
    p = positive / jnp.maximum(jnp.linalg.norm(positive, axis=-1, keepdims=True), eps)
    sim = (a @ p.T) / temperature
    logz = jax.scipy.special.logsumexp(sim, axis=-1)
    idx = jnp.arange(sim.shape[0])
    return jnp.mean(logz - sim[idx, idx])


if __name__ == "__main__":
    key = jax.random.PRNGKey(0)
    k1, k2, k3, k4, k5, k6 = jax.random.split(key, 6)

    # 1) Small case matching the module spec (batch 8, hidden 32).
    #    f32 MXU path first (tight tolerance), then the default bf16 MXU path.
    B, D = 8, 32
    anchor = jax.random.normal(k1, (B, D), dtype=jnp.float32)
    positive = jax.random.normal(k2, (B, D), dtype=jnp.float32)
    ref = _infonce_ref(anchor, positive)
    loss_f32 = jax.block_until_ready(
        infonce_loss(anchor, positive, compute_dtype=jnp.float32))
    assert jnp.allclose(loss_f32, ref, atol=1e-4, rtol=1e-4), (loss_f32, ref)
    loss_bf16 = jax.block_until_ready(infonce_loss(anchor, positive))
    assert jnp.allclose(loss_bf16, ref, atol=2e-2, rtol=2e-2), (loss_bf16, ref)

    # 2) Non-aligned multi-tile case: exercises the online LSE over column
    #    tiles, the k == i diagonal step, and the padded-column bias row.
    B2, D2 = 200, 72
    anchor2 = jax.random.normal(k3, (B2, D2), dtype=jnp.float32)
    positive2 = jax.random.normal(k4, (B2, D2), dtype=jnp.float32)
    ref2 = _infonce_ref(anchor2, positive2)
    loss2 = jax.block_until_ready(infonce_loss(anchor2, positive2, block_b=128))
    assert jnp.allclose(loss2, ref2, atol=2e-2, rtol=2e-2), (loss2, ref2)

    # 3) Contraction-tiled case (small block_d forces n_d > 1): exercises the
    #    (bt, bt) f32 VMEM accumulator path used for large D / v7x.
    B3, D3 = 64, 600
    anchor3 = jax.random.normal(k5, (B3, D3), dtype=jnp.float32)
    positive3 = jax.random.normal(k6, (B3, D3), dtype=jnp.float32)
    ref3 = _infonce_ref(anchor3, positive3)
    loss3 = jax.block_until_ready(infonce_loss(anchor3, positive3, block_d=256))
    assert jnp.allclose(loss3, ref3, atol=2e-2, rtol=2e-2), (loss3, ref3)

    print("KERNEL_OK")
</pallas_src>

<mosaic_0001>
module attributes {stable_mosaic.version = 11 : i64} {
  func.func @_infonce_kernel(%arg0: i32, %arg1: i32, %arg2: i32, %arg3: memref<8x128xf32, #tpu.memory_space<vmem>>, %arg4: memref<128x8xf32, #tpu.memory_space<vmem>>, %arg5: memref<8x1xf32, #tpu.memory_space<vmem>>, %arg6: memref<8x1xf32, #tpu.memory_space<vmem>>, %arg7: memref<8x1xf32, #tpu.memory_space<vmem>>, %arg8: memref<8x1xf32, #tpu.memory_space<vmem>>) attributes {dimension_semantics = [#tpu.dimension_semantics<parallel>, #tpu.dimension_semantics<arbitrary>, #tpu.dimension_semantics<arbitrary>], iteration_bounds = array<i64: 1, 1, 1>, scalar_prefetch = 0 : i64, scratch_operands = 3 : i64, tpu.core_type = #tpu.core_type<tc>, window_params = [{transform_indices = @transform_0, window_bounds = array<i64: 8, 128>}, {transform_indices = @transform_1, window_bounds = array<i64: 128, 8>}, {transform_indices = @transform_2, window_bounds = array<i64: 8, 1>}]} {
    %c0 = arith.constant 0 : index
    %c0_0 = arith.constant 0 : index
    %0 = vector.load %arg3[%c0, %c0_0] : memref<8x128xf32, #tpu.memory_space<vmem>>, vector<8x128xf32>
    %c0_1 = arith.constant 0 : index
    %c0_2 = arith.constant 0 : index
    %1 = vector.load %arg4[%c0_1, %c0_2] : memref<128x8xf32, #tpu.memory_space<vmem>>, vector<128x8xf32>
    %cst = arith.constant dense<0.000000e+00> : vector<8x8xf32>
    %2 = tpu.matmul %0, %1, %cst {dimension_numbers = #tpu.dot_dimension_numbers<[1], [0], [0], [1], [0, 0, 1, 1], [], []>} : vector<8x128xf32>, vector<128x8xf32>, vector<8x8xf32> -> vector<8x8xf32>
    %c0_i32 = arith.constant 0 : i32
    %3 = arith.cmpi eq, %arg1, %c0_i32 : i32
    %4 = arith.extui %3 : i1 to i32
    %c0_i32_3 = arith.constant 0 : i32
    %5 = arith.cmpi ne, %4, %c0_i32_3 : i32
    scf.if %5 {
      %cst_17 = arith.constant 0xFF800000 : f32
      %28 = vector.broadcast %cst_17 : f32 to vector<8x1xf32>
      %c0_18 = arith.constant 0 : index
      %c0_19 = arith.constant 0 : index
      %29 = vector.load %arg6[%c0_18, %c0_19] : memref<8x1xf32, #tpu.memory_space<vmem>>, vector<8x1xf32>
      tpu.vector_store %arg6[%c0_18, %c0_19], %28 {strides = array<i32>} : memref<8x1xf32, #tpu.memory_space<vmem>>, vector<8x1xf32>,
      %cst_20 = arith.constant 0.000000e+00 : f32
      %30 = vector.broadcast %cst_20 : f32 to vector<8x1xf32>
      %c0_21 = arith.constant 0 : index
      %c0_22 = arith.constant 0 : index
      %31 = vector.load %arg7[%c0_21, %c0_22] : memref<8x1xf32, #tpu.memory_space<vmem>>, vector<8x1xf32>
      tpu.vector_store %arg7[%c0_21, %c0_22], %30 {strides = array<i32>} : memref<8x1xf32, #tpu.memory_space<vmem>>, vector<8x1xf32>,
    } else {
    }
    %6 = arith.cmpi eq, %arg1, %arg0 : i32
    %7 = arith.extui %6 : i1 to i32
    %c0_i32_4 = arith.constant 0 : i32
    %8 = arith.cmpi ne, %7, %c0_i32_4 : i32
    scf.if %8 {
      %28 = tpu.iota {dimensions = array<i32: 0>} : vector<8x8xi32>
      %29 = tpu.iota {dimensions = array<i32: 1>} : vector<8x8xi32>
      %30 = arith.cmpi eq, %28, %29 : vector<8x8xi32>
      %cst_17 = arith.constant 0.000000e+00 : f32
      %31 = vector.broadcast %cst_17 : f32 to vector<8x8xf32>
      %32 = arith.select %30, %2, %31 : vector<8x8xi1>, vector<8x8xf32>
      %cst_18 = arith.constant dense<0.000000e+00> : vector<8xf32>
      %33 = vector.multi_reduction <add>, %32, %cst_18 [1] : vector<8x8xf32> to vector<8xf32>
      %34 = vector.shape_cast %33 : vector<8xf32> to vector<8x1xf32>
      %c0_19 = arith.constant 0 : index
      %c0_20 = arith.constant 0 : index
      %35 = vector.load %arg8[%c0_19, %c0_20] : memref<8x1xf32, #tpu.memory_space<vmem>>, vector<8x1xf32>
      tpu.vector_store %arg8[%c0_19, %c0_20], %34 {strides = array<i32>} : memref<8x1xf32, #tpu.memory_space<vmem>>, vector<8x1xf32>,
    } else {
    }
    %c0_5 = arith.constant 0 : index
    %c0_6 = arith.constant 0 : index
    %9 = vector.load %arg6[%c0_5, %c0_6] : memref<8x1xf32, #tpu.memory_space<vmem>>, vector<8x1xf32>
    %cst_7 = arith.constant dense<0xFF800000> : vector<8xf32>
    %10 = vector.multi_reduction <maximumf>, %2, %cst_7 [1] : vector<8x8xf32> to vector<8xf32>
    %11 = vector.shape_cast %10 : vector<8xf32> to vector<8x1xf32>
    %12 = arith.maximumf %9, %11 : vector<8x1xf32>
    %c0_8 = arith.constant 0 : index
    %c0_9 = arith.constant 0 : index
    %13 = vector.load %arg7[%c0_8, %c0_9] : memref<8x1xf32, #tpu.memory_space<vmem>>, vector<8x1xf32>
    %14 = arith.subf %9, %12 : vector<8x1xf32>
    %15 = math.exp %14 : vector<8x1xf32>
    %16 = arith.mulf %13, %15 : vector<8x1xf32>
    %17 = vector.broadcast %12 : vector<8x1xf32> to vector<8x8xf32>
    %18 = arith.subf %2, %17 : vector<8x8xf32>
    %19 = math.exp %18 : vector<8x8xf32>
    %cst_10 = arith.constant dense<0.000000e+00> : vector<8xf32>
    %20 = vector.multi_reduction <add>, %19, %cst_10 [1] : vector<8x8xf32> to vector<8xf32>
    %21 = vector.shape_cast %20 : vector<8xf32> to vector<8x1xf32>
    %22 = arith.addf %16, %21 : vector<8x1xf32>
    %c0_11 = arith.constant 0 : index
    %c0_12 = arith.constant 0 : index
    %23 = vector.load %arg7[%c0_11, %c0_12] : memref<8x1xf32, #tpu.memory_space<vmem>>, vector<8x1xf32>
    tpu.vector_store %arg7[%c0_11, %c0_12], %22 {strides = array<i32>} : memref<8x1xf32, #tpu.memory_space<vmem>>, vector<8x1xf32>,
    %c0_13 = arith.constant 0 : index
    %c0_14 = arith.constant 0 : index
    %24 = vector.load %arg6[%c0_13, %c0_14] : memref<8x1xf32, #tpu.memory_space<vmem>>, vector<8x1xf32>
    tpu.vector_store %arg6[%c0_13, %c0_14], %12 {strides = array<i32>} : memref<8x1xf32, #tpu.memory_space<vmem>>, vector<8x1xf32>,
    %c0_i32_15 = arith.constant 0 : i32
    %25 = arith.cmpi eq, %arg1, %c0_i32_15 : i32
    %26 = arith.extui %25 : i1 to i32
    %c0_i32_16 = arith.constant 0 : i32
    %27 = arith.cmpi ne, %26, %c0_i32_16 : i32
    scf.if %27 {
      %c0_17 = arith.constant 0 : index
      %c0_18 = arith.constant 0 : index
      %28 = vector.load %arg6[%c0_17, %c0_18] : memref<8x1xf32, #tpu.memory_space<vmem>>, vector<8x1xf32>
      %c0_19 = arith.constant 0 : index
      %c0_20 = arith.constant 0 : index
      %29 = vector.load %arg7[%c0_19, %c0_20] : memref<8x1xf32, #tpu.memory_space<vmem>>, vector<8x1xf32>
      %30 = math.log %29 : vector<8x1xf32>
      %31 = arith.addf %28, %30 : vector<8x1xf32>
      %c0_21 = arith.constant 0 : index
      %c0_22 = arith.constant 0 : index
      %32 = vector.load %arg8[%c0_21, %c0_22] : memref<8x1xf32, #tpu.memory_space<vmem>>, vector<8x1xf32>
      %33 = arith.subf %31, %32 : vector<8x1xf32>
      %c0_23 = arith.constant 0 : index
      %c0_24 = arith.constant 0 : index
      %34 = vector.load %arg5[%c0_23, %c0_24] : memref<8x1xf32, #tpu.memory_space<vmem>>, vector<8x1xf32>
      tpu.vector_store %arg5[%c0_23, %c0_24], %33 {strides = array<i32>} : memref<8x1xf32, #tpu.memory_space<vmem>>, vector<8x1xf32>,
    } else {
    }
    return
  }
  func.func @transform_0(%arg0: i32, %arg1: i32, %arg2: i32) -> (i32, i32) {
    %c0_i32 = arith.constant 0 : i32
    return %arg0, %arg2 : i32, i32
  }
  func.func @transform_1(%arg0: i32, %arg1: i32, %arg2: i32) -> (i32, i32) {
    %c0_i32 = arith.constant 0 : i32
    return %arg2, %arg1 : i32, i32
  }
  func.func @transform_2(%arg0: i32, %arg1: i32, %arg2: i32) -> (i32, i32) {
    %c0_i32 = arith.constant 0 : i32
    %c0_i32_0 = arith.constant 0 : i32
    return %arg0, %c0_i32 : i32, i32
  }
}

</mosaic_0001>

<llo_original>
// kernel: tpu_custom_call.1
$region0: #{tpu_custom_call.1}
  #allocation0 [shape = 'u32[]', space=smem, size = 0x4, offset = 0x4, fixed_abs, tag = 'smem constant byte address 0x4 - core index']
  #allocation1 [shape = 'u32[144,128]{1,0:T(1,128)}', space=vmem, size = 0x12000, scoped, tag = 'internal scratch']
  #allocation2 [shape = 'f32[8,1]{1,0:T(8,128)}', space=vmem, size = 0x1000, scoped, tag = 'scratch operand']
  #allocation3 [shape = 'f32[8,1]{1,0:T(8,128)}', space=vmem, size = 0x1000, scoped, tag = 'scratch operand']
  #allocation4 [shape = 'f32[8,1]{1,0:T(8,128)}', space=vmem, size = 0x1000, scoped, tag = 'scratch operand']
  %s0 = inlined_call_operand.vmem [shape: f32[8,128], index: 0, kind: input, shape index: {}]
  %s1 = inlined_call_operand.vmem [shape: f32[128,8], index: 1, kind: input, shape index: {}]
  %s2 = inlined_call_operand.vmem [shape: f32[8,1], index: 2, kind: output, shape index: {}]
  %s3 = sld [smem:[#allocation0]]
  $region30: #{tpu_custom_call.1} parent=0
    _
  %s5 = ssub.s32 1, %s3
  %s6 = scalar_select 0, %s5, %s3
  // Predicated region
  $region2: #{tpu_custom_call.1} parent=0 // pred_check
    _
  $region3: #{tpu_custom_call.1} parent=0 // pred_check_branch
    %8 = sbr.rel (0) target = $region5
  $region4: #{tpu_custom_call.1} parent=0 // pred_region
    _
  $region5: #{tpu_custom_call.1} parent=0 // pred_fallthru
    _
  // Predicated region
  $region6: #{tpu_custom_call.1} parent=0 // pred_check
    _
  $region7: #{tpu_custom_call.1} parent=0 // pred_check_branch
    %10 = sbr.rel (0) target = $region9
  $region8: #{tpu_custom_call.1} parent=0 // pred_region
    _
  $region9: #{tpu_custom_call.1} parent=0 // pred_fallthru
    _
  %v11 = vld [vmem:[%s0] sm:$0xff]
  %v12 = vld [vmem:[%s1] sm:$0xff]
  %v13 = vld [vmem:[%s1 + $0x8] sm:$0xff]
  %v14 = vld [vmem:[%s1 + $0x10] sm:$0xff]
  %v15 = vld [vmem:[%s1 + $0x18] sm:$0xff]
  %v16 = vld [vmem:[%s1 + $0x20] sm:$0xff]
  %v17 = vld [vmem:[%s1 + $0x28] sm:$0xff]
  %v18 = vld [vmem:[%s1 + $0x30] sm:$0xff]
  %v19 = vld [vmem:[%s1 + $0x38] sm:$0xff]
  %v20 = vld [vmem:[%s1 + $0x40] sm:$0xff]
  %v21 = vld [vmem:[%s1 + $0x48] sm:$0xff]
  %v22 = vld [vmem:[%s1 + $0x50] sm:$0xff]
  %v23 = vld [vmem:[%s1 + $0x58] sm:$0xff]
  %v24 = vld [vmem:[%s1 + $0x60] sm:$0xff]
  %v25 = vld [vmem:[%s1 + $0x68] sm:$0xff]
  %v26 = vld [vmem:[%s1 + $0x70] sm:$0xff]
  %v27 = vld [vmem:[%s1 + $0x78] sm:$0xff]
  %28 = vmatprep.subr.mxu0 0.0
  %29 = vmatpush1.msra.mxu0 %v12
  %30 = vmatprep.subr.mxu0 0.0
  %31 = vmatpush1.msra.mxu0 %v13
  %32 = vmatprep.subr.mxu0 0.0
  %33 = vmatpush1.msra.mxu0 %v14
  %34 = vmatprep.subr.mxu0 0.0
  %35 = vmatpush1.msra.mxu0 %v15
  %36 = vmatprep.subr.mxu0 0.0
  %37 = vmatpush1.msra.mxu0 %v16
  %38 = vmatprep.subr.mxu0 0.0
  %39 = vmatpush1.msra.mxu0 %v17
  %40 = vmatprep.subr.mxu0 0.0
  %41 = vmatpush1.msra.mxu0 %v18
  %42 = vmatprep.subr.mxu0 0.0
  %43 = vmatpush1.msra.mxu0 %v19
  %44 = vmatprep.subr.mxu0 0.0
  %45 = vmatpush1.msra.mxu0 %v20
  %46 = vmatprep.subr.mxu0 0.0
  %47 = vmatpush1.msra.mxu0 %v21
  %48 = vmatprep.subr.mxu0 0.0
  %49 = vmatpush1.msra.mxu0 %v22
  %50 = vmatprep.subr.mxu0 0.0
  %51 = vmatpush1.msra.mxu0 %v23
  %52 = vmatprep.subr.mxu0 0.0
  %53 = vmatpush1.msra.mxu0 %v24
  %54 = vmatprep.subr.mxu0 0.0
  %55 = vmatpush1.msra.mxu0 %v25
  %56 = vmatprep.subr.mxu0 0.0
  %57 = vmatpush1.msra.mxu0 %v26
  %58 = vmatprep.subr.mxu0 0.0
  %59 = vmatpush1.msra.mxu0 %v27
  %60 = vmatprep.subr.mxu0 0.0
  %61 = vmatpush1.msra.mxu0 0.0
  %62 = vmatprep.subr.mxu0 0.0
  %63 = vmatpush1.msra.mxu0 0.0
  %64 = vmatprep.subr.mxu0 0.0
  %65 = vmatpush1.msra.mxu0 0.0
  %66 = vmatprep.subr.mxu0 0.0
  %67 = vmatpush1.msra.mxu0 0.0
  %68 = vmatprep.subr.mxu0 0.0
  %69 = vmatpush1.msra.mxu0 0.0
  %70 = vmatprep.subr.mxu0 0.0
  %71 = vmatpush1.msra.mxu0 0.0
  %72 = vmatprep.subr.mxu0 0.0
  %73 = vmatpush1.msra.mxu0 0.0
  %74 = vmatprep.subr.mxu0 0.0
  %75 = vmatpush1.msra.mxu0 0.0
  %76 = vmatprep.subr.mxu0 0.0
  %77 = vmatpush1.msra.mxu0 0.0
  %78 = vmatprep.subr.mxu0 0.0
  %79 = vmatpush1.msra.mxu0 0.0
  %80 = vmatprep.subr.mxu0 0.0
  %81 = vmatpush1.msra.mxu0 0.0
  %82 = vmatprep.subr.mxu0 0.0
  %83 = vmatpush1.msra.mxu0 0.0
  %84 = vmatprep.subr.mxu0 0.0
  %85 = vmatpush1.msra.mxu0 0.0
  %86 = vmatprep.subr.mxu0 0.0
  %87 = vmatpush1.msra.mxu0 0.0
  %88 = vmatprep.subr.mxu0 0.0
  %89 = vmatpush1.msra.mxu0 0.0
  %90 = vmatprep.subr.mxu0 0.0
  %91 = vmatpush1.msra.mxu0 0.0
  %92 = vmatprep.mubr.f32.mxu0 0.0
  %93 = vmatmul.mubr.f32.gmra.mrb[0].mxu0 %v11
  %v94 = vpop.f32.mrb[0].mxu0
  %v95 = vadd.f32 0.0, %v94
  %v96 = vpop.f32.mrb[0].mxu0
  %97 = vdwg.mxu0
  %p98 = scmp.eq.s32.totalorder 0, 0
  // Predicated region
  $region10: #{tpu_custom_call.1} parent=0 // pred_check
    %p99 = pneg %p98
  $region11: #{tpu_custom_call.1} parent=0 // pred_check_branch
    %101 = sbr.rel (%p99) target = $region13
  $region12: #{tpu_custom_call.1} parent=0 // pred_region
    %vm102 = vcmask 7168
    %103 = vst.msk [vmem:[#allocation2] sm:$0xff] %vm102, -inf
    %104 = vst.msk [vmem:[#allocation3] sm:$0xff] %vm102, 0.0
  $region13: #{tpu_custom_call.1} parent=0 // pred_fallthru
    _
  %p105 = scmp.eq.s32.totalorder 0, 0
  // Predicated region
  $region14: #{tpu_custom_call.1} parent=0 // pred_check
    %p106 = pneg %p105
  $region15: #{tpu_custom_call.1} parent=0 // pred_check_branch
    %108 = sbr.rel (%p106) target = $region17
  $region16: #{tpu_custom_call.1} parent=0 // pred_region
    %v109 = vlaneseq
    %v110 = vshrl.u32 %v109, 7
    %v111 = vlaneseq
    %v112 = vand.u32 %v111, 127
    %vm113 = vcmp.eq.s32.totalorder %v110, %v112
    %v114 = vsel %vm113, %v95, 0.0
    %vm115 = vcmask 64512
    %v116 = vsel %vm115, %v114, 0.0
    %117 = vadd.xlane.f32.xlu0 %v116
    %v118 = vpop.xlane.xlu0 %117
    %vm119 = vcmask 7168
    %120 = vst.msk [vmem:[#allocation4] sm:$0xff] %vm119, %v118
  $region17: #{tpu_custom_call.1} parent=0 // pred_fallthru
    _
  %v121 = vld [vmem:[#allocation2] sm:$0xff]
  %vm122 = vcmask 64512
  %v123 = vsel %vm122, %v95, -inf
  %124 = vmax.xlane.f32.xlu0 %v123
  %v125 = vpop.xlane.xlu0 %124
  %v126 = vmax.f32 %v121, %v125
  %v127 = vld [vmem:[#allocation3] sm:$0xff]
  %v128 = vsub.f32 %v121, %v126
  %v129 = vmul.f32 %v128, 1.442695
  %v130 = vpow.pop %v129
  %v131 = vmul.f32 %v127, %v130
  %133 = vset.pattern.permute.xlu0 0
  %134 = vperm.xlu0 %133, %v126
  %v135 = vpop.permute.xlu0 %134
  %v137 = vsub.f32 %v95, %v135
  %v138 = vmul.f32 %v137, 1.442695
  %v139 = vpow.pop %v138
  %v140 = vsel %vm122, %v139, 0.0
  %141 = vadd.xlane.f32.xlu0 %v140
  %v142 = vpop.xlane.xlu0 %141
  %v143 = vadd.f32 %v131, %v142
  %vm144 = vcmask 7168
  %145 = vst.msk [vmem:[#allocation3] sm:$0xff] %vm144, %v143
  %146 = vst.msk [vmem:[#allocation2] sm:$0xff] %vm144, %v126
  // Predicated region
  $region18: #{tpu_custom_call.1} parent=0 // pred_check
    %p147 = pneg %p98
  $region19: #{tpu_custom_call.1} parent=0 // pred_check_branch
    %149 = sbr.rel (%p147) target = $region21
  $region20: #{tpu_custom_call.1} parent=0 // pred_region
    %v150 = vld [vmem:[#allocation2] sm:$0xff]
    %v151 = vld [vmem:[#allocation3] sm:$0xff]
    %v152 = vlog2.pop %v151
    %v153 = vmul.f32 %v152, 0.6931472
    %v154 = vadd.f32 %v150, %v153
    %v155 = vld [vmem:[#allocation4] sm:$0xff]
    %v156 = vsub.f32 %v154, %v155
    %157 = vst.msk [vmem:[%s2] sm:$0xff] %vm144, %v156
  $region21: #{tpu_custom_call.1} parent=0 // pred_fallthru
    _
  // Predicated region
  $region22: #{tpu_custom_call.1} parent=0 // pred_check
    _
  $region23: #{tpu_custom_call.1} parent=0 // pred_check_branch
    %159 = sbr.rel (0) target = $region25
  $region24: #{tpu_custom_call.1} parent=0 // pred_region
    _
  $region25: #{tpu_custom_call.1} parent=0 // pred_fallthru
    _
  // Predicated region
  $region26: #{tpu_custom_call.1} parent=0 // pred_check
    _
  $region27: #{tpu_custom_call.1} parent=0 // pred_check_branch
    %161 = sbr.rel (0) target = $region29
  $region28: #{tpu_custom_call.1} parent=0 // pred_region
    _
  $region29: #{tpu_custom_call.1} parent=0 // pred_fallthru
    _

</llo_original>
